<compile_context>
chip_gen: v7x
topology: tpu7x:2x2x1
jax: 0.10.0
libtpu: 0.0.40
codegen_flags: <defaults>
</compile_context>

<pallas_src>
import jax
import jax.numpy as jnp
from jax import lax
from jax.experimental import pallas as pl
from jax.experimental.pallas import tpu as pltpu


def attention_kernel(hidden_ref, enc_ref, wh_ref, we_ref, b_ref, v_ref, out_ref):
    # hidden_ref: (bt, H)      enc_ref: (bt, S, H)
    # wh_ref/we_ref: (H, H) in torch [out, in] layout
    # b_ref: (1, H)  v_ref: (1, H)   out_ref: (bt, S)
    bt, S, H = enc_ref.shape

    # S-invariant hidden projection + bias, hoisted: done once per batch block.
    # dot_general contracts on the weights' input axis (x @ W^T, no transpose op).
    hb = lax.dot_general(
        hidden_ref[...], wh_ref[...],
        dimension_numbers=(((1,), (1,)), ((), ())),
        preferred_element_type=jnp.float32,
    ) + b_ref[...]                                                     # (bt, H) f32

    # Single flattened 2-D matmul: (bt*S, H) x (H, H)^T -> maximizes MXU M-dim.
    enc2d = enc_ref[...].reshape(bt * S, H)
    e_proj = lax.dot_general(
        enc2d, we_ref[...],
        dimension_numbers=(((1,), (1,)), ((), ())),
        preferred_element_type=jnp.float32,
    ).reshape(bt, S, H)                                                # (bt, S, H) f32

    # Fused energy -> v-weighted lane reduction (tanh on EUP, reduce on XLU).
    energy = jnp.tanh(e_proj + hb[:, None, :])
    scores = jnp.sum(energy * v_ref[...][None, :, :], axis=2)          # (bt, S)

    # Softmax over the seq axis (fits in one block, single pass).
    m = jnp.max(scores, axis=1, keepdims=True)
    ex = jnp.exp(scores - m)
    out_ref[...] = (ex / jnp.sum(ex, axis=1, keepdims=True)).astype(out_ref.dtype)


def _choose_b_tile(B, S, H, itemsize, budget_bytes=8 << 20):
    """Largest batch tile whose working set (2x double-buffered enc tile in the
    input dtype + one fused f32 energy tile) fits a conservative per-tile VMEM
    budget that is safe on v5e/v6e (128 MiB) and v7x (64 MiB)."""
    per_b = S * H * (2 * itemsize + 4)
    want = max(1, budget_bytes // max(per_b, 1))
    if want >= B:
        return B
    # Tile must divide B and satisfy the sublane rule (multiple of 8, or == B).
    for bt in range(min(int(want), B), 0, -1):
        if B % bt == 0 and (bt % 8 == 0 or bt == B):
            return bt
    return B


def attention_forward(hidden, encoder_outputs, w_att, b_att, v_w):
    """hidden: (B, H), encoder_outputs: (B, S, H),
       w_att: (H, 2H) torch [out, in], b_att: (H,), v_w: (1, H)."""
    B, S, H = encoder_outputs.shape

    # Split the (H, 2H) weight into the `hidden` / `encoder` halves.
    # Kept in [out, in] layout; the kernel contracts on the input axis directly.
    w_h = w_att[:, :H]                      # (H, H)
    w_e = w_att[:, H:]                      # (H, H)
    b2 = b_att.reshape(1, H)
    v2 = v_w.reshape(1, H)

    b_tile = _choose_b_tile(B, S, H, jnp.dtype(encoder_outputs.dtype).itemsize)
    grid = (B // b_tile,)

    return pl.pallas_call(
        attention_kernel,
        out_shape=jax.ShapeDtypeStruct((B, S), jnp.float32),
        grid=grid,
        in_specs=[
            pl.BlockSpec((b_tile, H), lambda b: (b, 0)),        # hidden tile
            pl.BlockSpec((b_tile, S, H), lambda b: (b, 0, 0)),  # encoder tile
            pl.BlockSpec((H, H), lambda b: (0, 0)),             # Wh (resident)
            pl.BlockSpec((H, H), lambda b: (0, 0)),             # We (resident)
            pl.BlockSpec((1, H), lambda b: (0, 0)),             # bias (resident)
            pl.BlockSpec((1, H), lambda b: (0, 0)),             # v (resident)
        ],
        out_specs=pl.BlockSpec((b_tile, S), lambda b: (b, 0)),
        compiler_params=pltpu.CompilerParams(
            dimension_semantics=("parallel",),
        ),
    )(hidden, encoder_outputs, w_h, w_e, b2, v2)


def attention_reference(hidden, encoder_outputs, w_att, b_att, v_w):
    B, S, H = encoder_outputs.shape
    hid = jnp.repeat(hidden[:, None, :], S, axis=1)                 # (B, S, H)
    cat = jnp.concatenate([hid, encoder_outputs], axis=2)           # (B, S, 2H)
    energy = jnp.tanh(jnp.einsum("bsi,oi->bso", cat, w_att) + b_att)
    attn = jnp.einsum("bsh,oh->bso", energy, v_w)[..., 0]           # (B, S)
    return jax.nn.softmax(attn, axis=1)


if __name__ == "__main__":
    B, S, H = 2, 8, 32
    key = jax.random.PRNGKey(0)
    k1, k2, k3, k4, k5 = jax.random.split(key, 5)

    hidden = jax.random.normal(k1, (B, H), dtype=jnp.float32)
    encoder_outputs = jax.random.normal(k2, (B, S, H), dtype=jnp.float32)

    # Deterministic parameter init (uniform, roughly matching nn.Linear scale).
    lim_att = 1.0 / jnp.sqrt(2.0 * H)
    lim_v = 1.0 / jnp.sqrt(1.0 * H)
    w_att = jax.random.uniform(k3, (H, 2 * H), minval=-lim_att, maxval=lim_att,
                               dtype=jnp.float32)
    b_att = jax.random.uniform(k4, (H,), minval=-lim_att, maxval=lim_att,
                               dtype=jnp.float32)
    v_w = jax.random.uniform(k5, (1, H), minval=-lim_v, maxval=lim_v,
                             dtype=jnp.float32)

    out = attention_forward(hidden, encoder_outputs, w_att, b_att, v_w)
    out = jax.block_until_ready(out)

    ref = attention_reference(hidden, encoder_outputs, w_att, b_att, v_w)
    assert out.shape == (B, S)
    assert jnp.allclose(out, ref, atol=1e-5, rtol=1e-5), "mismatch vs pure-JAX reference"
    assert jnp.allclose(jnp.sum(out, axis=1), 1.0, atol=1e-5)

    print("KERNEL_OK")
</pallas_src>

<mosaic_0001>
module attributes {stable_mosaic.version = 11 : i64} {
  func.func @attention_kernel(%arg0: i32, %arg1: memref<2x32xf32, #tpu.memory_space<vmem>>, %arg2: memref<2x8x32xf32, #tpu.memory_space<vmem>>, %arg3: memref<32x32xf32, #tpu.memory_space<vmem>>, %arg4: memref<32x32xf32, #tpu.memory_space<vmem>>, %arg5: memref<1x32xf32, #tpu.memory_space<vmem>>, %arg6: memref<1x32xf32, #tpu.memory_space<vmem>>, %arg7: memref<2x8xf32, #tpu.memory_space<vmem>>) attributes {dimension_semantics = [#tpu.dimension_semantics<parallel>], iteration_bounds = array<i64: 1>, scalar_prefetch = 0 : i64, scratch_operands = 0 : i64, tpu.core_type = #tpu.core_type<tc>, window_params = [{transform_indices = @transform_0, window_bounds = array<i64: 2, 32>}, {transform_indices = @transform_1, window_bounds = array<i64: 2, 8, 32>}, {pipeline_mode = #tpu.pipeline_mode<synchronous>, transform_indices = @transform_2, window_bounds = array<i64: 32, 32>}, {pipeline_mode = #tpu.pipeline_mode<synchronous>, transform_indices = @transform_3, window_bounds = array<i64: 32, 32>}, {pipeline_mode = #tpu.pipeline_mode<synchronous>, transform_indices = @transform_4, window_bounds = array<i64: 1, 32>}, {pipeline_mode = #tpu.pipeline_mode<synchronous>, transform_indices = @transform_5, window_bounds = array<i64: 1, 32>}, {transform_indices = @transform_6, window_bounds = array<i64: 2, 8>}]} {
    %c0 = arith.constant 0 : index
    %c0_0 = arith.constant 0 : index
    %0 = vector.load %arg1[%c0, %c0_0] : memref<2x32xf32, #tpu.memory_space<vmem>>, vector<2x32xf32>
    %c0_1 = arith.constant 0 : index
    %c0_2 = arith.constant 0 : index
    %1 = vector.load %arg3[%c0_1, %c0_2] : memref<32x32xf32, #tpu.memory_space<vmem>>, vector<32x32xf32>
    %cst = arith.constant dense<0.000000e+00> : vector<2x32xf32>
    %2 = tpu.matmul %0, %1, %cst {dimension_numbers = #tpu.dot_dimension_numbers<[1], [1], [0], [0], [0, 0, 1, 0], [], []>} : vector<2x32xf32>, vector<32x32xf32>, vector<2x32xf32> -> vector<2x32xf32>
    %c0_3 = arith.constant 0 : index
    %c0_4 = arith.constant 0 : index
    %3 = vector.load %arg5[%c0_3, %c0_4] : memref<1x32xf32, #tpu.memory_space<vmem>>, vector<1x32xf32>
    %4 = vector.broadcast %3 : vector<1x32xf32> to vector<2x32xf32>
    %5 = arith.addf %2, %4 : vector<2x32xf32>
    %c0_5 = arith.constant 0 : index
    %c0_6 = arith.constant 0 : index
    %c0_7 = arith.constant 0 : index
    %6 = vector.load %arg2[%c0_5, %c0_6, %c0_7] : memref<2x8x32xf32, #tpu.memory_space<vmem>>, vector<2x8x32xf32>
    %7 = vector.shape_cast %6 : vector<2x8x32xf32> to vector<16x32xf32>
    %c0_8 = arith.constant 0 : index
    %c0_9 = arith.constant 0 : index
    %8 = vector.load %arg4[%c0_8, %c0_9] : memref<32x32xf32, #tpu.memory_space<vmem>>, vector<32x32xf32>
    %cst_10 = arith.constant dense<0.000000e+00> : vector<16x32xf32>
    %9 = tpu.matmul %7, %8, %cst_10 {dimension_numbers = #tpu.dot_dimension_numbers<[1], [1], [0], [0], [0, 0, 1, 0], [], []>} : vector<16x32xf32>, vector<32x32xf32>, vector<16x32xf32> -> vector<16x32xf32>
    %10 = vector.shape_cast %9 : vector<16x32xf32> to vector<2x8x32xf32>
    %11 = vector.shape_cast %5 : vector<2x32xf32> to vector<2x1x32xf32>
    %12 = vector.broadcast %11 : vector<2x1x32xf32> to vector<2x8x32xf32>
    %13 = arith.addf %10, %12 : vector<2x8x32xf32>
    %14 = math.tanh %13 : vector<2x8x32xf32>
    %c0_11 = arith.constant 0 : index
    %c0_12 = arith.constant 0 : index
    %15 = vector.load %arg6[%c0_11, %c0_12] : memref<1x32xf32, #tpu.memory_space<vmem>>, vector<1x32xf32>
    %16 = vector.shape_cast %15 : vector<1x32xf32> to vector<1x1x32xf32>
    %17 = vector.broadcast %16 : vector<1x1x32xf32> to vector<2x8x32xf32>
    %18 = arith.mulf %14, %17 : vector<2x8x32xf32>
    %cst_13 = arith.constant dense<0.000000e+00> : vector<2x8xf32>
    %19 = vector.multi_reduction <add>, %18, %cst_13 [2] : vector<2x8x32xf32> to vector<2x8xf32>
    %cst_14 = arith.constant dense<0xFF800000> : vector<2xf32>
    %20 = vector.multi_reduction <maximumf>, %19, %cst_14 [1] : vector<2x8xf32> to vector<2xf32>
    %21 = vector.shape_cast %20 : vector<2xf32> to vector<2x1xf32>
    %22 = vector.broadcast %21 : vector<2x1xf32> to vector<2x8xf32>
    %23 = arith.subf %19, %22 : vector<2x8xf32>
    %24 = math.exp %23 : vector<2x8xf32>
    %cst_15 = arith.constant dense<0.000000e+00> : vector<2xf32>
    %25 = vector.multi_reduction <add>, %24, %cst_15 [1] : vector<2x8xf32> to vector<2xf32>
    %26 = vector.shape_cast %25 : vector<2xf32> to vector<2x1xf32>
    %27 = vector.broadcast %26 : vector<2x1xf32> to vector<2x8xf32>
    %28 = arith.divf %24, %27 : vector<2x8xf32>
    %c0_16 = arith.constant 0 : index
    %c0_17 = arith.constant 0 : index
    %29 = vector.load %arg7[%c0_16, %c0_17] : memref<2x8xf32, #tpu.memory_space<vmem>>, vector<2x8xf32>
    tpu.vector_store %arg7[%c0_16, %c0_17], %28 {strides = array<i32>} : memref<2x8xf32, #tpu.memory_space<vmem>>, vector<2x8xf32>,
    return
  }
  func.func @transform_0(%arg0: i32) -> (i32, i32) {
    %c0_i32 = arith.constant 0 : i32
    %c0_i32_0 = arith.constant 0 : i32
    return %arg0, %c0_i32 : i32, i32
  }
  func.func @transform_1(%arg0: i32) -> (i32, i32, i32) {
    %c0_i32 = arith.constant 0 : i32
    %c0_i32_0 = arith.constant 0 : i32
    %c0_i32_1 = arith.constant 0 : i32
    return %arg0, %c0_i32, %c0_i32_0 : i32, i32, i32
  }
  func.func @transform_2(%arg0: i32) -> (i32, i32) {
    %c0_i32 = arith.constant 0 : i32
    %c0_i32_0 = arith.constant 0 : i32
    %c0_i32_1 = arith.constant 0 : i32
    return %c0_i32, %c0_i32_0 : i32, i32
  }
  func.func @transform_3(%arg0: i32) -> (i32, i32) {
    %c0_i32 = arith.constant 0 : i32
    %c0_i32_0 = arith.constant 0 : i32
    %c0_i32_1 = arith.constant 0 : i32
    return %c0_i32, %c0_i32_0 : i32, i32
  }
  func.func @transform_4(%arg0: i32) -> (i32, i32) {
    %c0_i32 = arith.constant 0 : i32
    %c0_i32_0 = arith.constant 0 : i32
    %c0_i32_1 = arith.constant 0 : i32
    return %c0_i32, %c0_i32_0 : i32, i32
  }
  func.func @transform_5(%arg0: i32) -> (i32, i32) {
    %c0_i32 = arith.constant 0 : i32
    %c0_i32_0 = arith.constant 0 : i32
    %c0_i32_1 = arith.constant 0 : i32
    return %c0_i32, %c0_i32_0 : i32, i32
  }
  func.func @transform_6(%arg0: i32) -> (i32, i32) {
    %c0_i32 = arith.constant 0 : i32
    %c0_i32_0 = arith.constant 0 : i32
    return %arg0, %c0_i32 : i32, i32
  }
}

</mosaic_0001>

<llo_original>
// kernel: tpu_custom_call.1
$region0: #{tpu_custom_call.1}
  #allocation0 [shape = 'u32[]', space=smem, size = 0x4, offset = 0x4, fixed_abs, tag = 'smem constant byte address 0x4 - core index']
  #allocation1 [shape = 'u32[144,128]{1,0:T(1,128)}', space=vmem, size = 0x12000, scoped, tag = 'internal scratch']
  %s0 = inlined_call_operand.hbm [shape: f32[2,32], index: 0, kind: input, shape index: {}]
  %s1 = inlined_call_operand.hbm [shape: f32[2,8,32], index: 1, kind: input, shape index: {}]
  %s2 = inlined_call_operand.hbm [shape: f32[32,32], index: 2, kind: input, shape index: {}]
  %s3 = inlined_call_operand.hbm [shape: f32[32,32], index: 3, kind: input, shape index: {}]
  %s4 = inlined_call_operand.vmem [shape: f32[1,32], index: 4, kind: input, shape index: {}]
  %s5 = inlined_call_operand.vmem [shape: f32[1,32], index: 5, kind: input, shape index: {}]
  %s6 = inlined_call_operand.hbm [shape: f32[2,8], index: 6, kind: output, shape index: {}]
  %s7 = sld [smem:[#allocation0]]
  $region50: #{tpu_custom_call.1} parent=0
    _
  %s9 = ssub.s32 1, %s7
  %s10 = scalar_select 0, %s9, %s7
  $region1: #{tpu_custom_call.1} parent=0
    #allocation2 [shape = 'u8[1024]{0}', space=vmem, size = 0x400, scoped, tag = 'input window, operand 0, single buffered']
    #allocation3 [shape = 's32[1]{0}', space=sflag, size = 0x4, scoped, tag = 'scoped memory for tpu_custom_call.1']
    #allocation4 [shape = 's32[1]{0}', space=sflag, size = 0x4, scoped, tag = 'scoped memory for tpu_custom_call.1']
    #allocation5 [shape = 'u8[8192]{0}', space=vmem, size = 0x2000, scoped, tag = 'input window, operand 1, single buffered']
    #allocation6 [shape = 's32[1]{0}', space=sflag, size = 0x4, scoped, tag = 'scoped memory for tpu_custom_call.1']
    #allocation7 [shape = 'u8[16384]{0}', space=vmem, size = 0x4000, scoped, tag = 'input window, operand 2, single buffered']
    #allocation8 [shape = 'u8[16384]{0}', space=vmem, size = 0x4000, scoped, tag = 'input window, operand 3, single buffered']
    #allocation9 [shape = 's32[1]{0}', space=sflag, size = 0x4, scoped, tag = 'scoped memory for tpu_custom_call.1']
    #allocation10 [shape = 'u8[1024]{0}', space=vmem, size = 0x400, scoped, tag = 'output window, operand 0, single buffered']
    %11 = vsyncpa [#allocation3], 0
    %12 = vsyncpa [#allocation6], 0
    %13 = vsyncpa [#allocation9], 0
    %14 = vsyncpa [#allocation4], 0
    // Predicated region
    $region2: #{tpu_custom_call.1} parent=1 // pred_check
      _
    $region3: #{tpu_custom_call.1} parent=1 // pred_check_branch
      %16 = sbr.rel (0) target = $region5
    $region4: #{tpu_custom_call.1} parent=1 // pred_region
      %s18 = ssub.s32 32, 32
      %19 = vsyncadd [#allocation3], %s18
      %s21 = sshll.u32 [#allocation2], 4
      %s22 = int_to_ptr.vmem [resolvable:$true] %s21
      %24 = dma.hbm_to_vmem [thread:$0]  %s0, 32, %s22, [#allocation3]
    $region5: #{tpu_custom_call.1} parent=1 // pred_fallthru
      _
    // Predicated region
    $region6: #{tpu_custom_call.1} parent=1 // pred_check
      _
    $region7: #{tpu_custom_call.1} parent=1 // pred_check_branch
      %26 = sbr.rel (0) target = $region9
    $region8: #{tpu_custom_call.1} parent=1 // pred_region
      %s28 = ssub.s32 256, 256
      %29 = vsyncadd [#allocation6], %s28
      %s30 = sshll.u32 [#allocation5], 4
      %s31 = int_to_ptr.vmem [resolvable:$true] %s30
      %36 = dma.hbm_to_vmem [thread:$0]  %s1, 256, %s31, [#allocation6], 128, 128, 8
    $region9: #{tpu_custom_call.1} parent=1 // pred_fallthru
      _
    // Predicated region
    $region10: #{tpu_custom_call.1} parent=1 // pred_check
      _
    $region11: #{tpu_custom_call.1} parent=1 // pred_check_branch
      %38 = sbr.rel (0) target = $region13
    $region12: #{tpu_custom_call.1} parent=1 // pred_region
      %s40 = ssub.s32 512, 512
      %41 = vsyncadd [#allocation6], %s40
      %s42 = sshll.u32 [#allocation7], 4
      %s43 = int_to_ptr.vmem [resolvable:$true] %s42
      %48 = dma.hbm_to_vmem [thread:$0]  %s2, 512, %s43, [#allocation6], 128, 128, 8
    $region13: #{tpu_custom_call.1} parent=1 // pred_fallthru
      _
    // Predicated region
    $region14: #{tpu_custom_call.1} parent=1 // pred_check
      _
    $region15: #{tpu_custom_call.1} parent=1 // pred_check_branch
      %50 = sbr.rel (0) target = $region17
    $region16: #{tpu_custom_call.1} parent=1 // pred_region
      %s52 = ssub.s32 512, 512
      %53 = vsyncadd [#allocation9], %s52
      %s54 = sshll.u32 [#allocation8], 4
      %s55 = int_to_ptr.vmem [resolvable:$true] %s54
      %60 = dma.hbm_to_vmem [thread:$0]  %s3, 512, %s55, [#allocation9], 128, 128, 8
    $region17: #{tpu_custom_call.1} parent=1 // pred_fallthru
      _
    // Predicated region
    $region18: #{tpu_custom_call.1} parent=1 // pred_check
      _
    $region19: #{tpu_custom_call.1} parent=1 // pred_check_branch
      %62 = sbr.rel (0) target = $region21
    $region20: #{tpu_custom_call.1} parent=1 // pred_region
      _
    $region21: #{tpu_custom_call.1} parent=1 // pred_fallthru
      _
    // Predicated region
    $region22: #{tpu_custom_call.1} parent=1 // pred_check
      _
    $region23: #{tpu_custom_call.1} parent=1 // pred_check_branch
      %64 = sbr.rel (0) target = $region25
    $region24: #{tpu_custom_call.1} parent=1 // pred_region
      _
    $region25: #{tpu_custom_call.1} parent=1 // pred_fallthru
      _
    // Predicated region
    $region26: #{tpu_custom_call.1} parent=1 // pred_check
      _
    $region27: #{tpu_custom_call.1} parent=1 // pred_check_branch
      %66 = sbr.rel (0) target = $region29
    $region28: #{tpu_custom_call.1} parent=1 // pred_region
      %67 = dma.done [#allocation3], 32
    $region29: #{tpu_custom_call.1} parent=1 // pred_fallthru
      _
    // Predicated region
    $region30: #{tpu_custom_call.1} parent=1 // pred_check
      _
    $region31: #{tpu_custom_call.1} parent=1 // pred_check_branch
      %69 = sbr.rel (0) target = $region33
    $region32: #{tpu_custom_call.1} parent=1 // pred_region
      %70 = dma.done [#allocation6], 256
    $region33: #{tpu_custom_call.1} parent=1 // pred_fallthru
      _
    // Predicated region
    $region34: #{tpu_custom_call.1} parent=1 // pred_check
      _
    $region35: #{tpu_custom_call.1} parent=1 // pred_check_branch
      %72 = sbr.rel (0) target = $region37
    $region36: #{tpu_custom_call.1} parent=1 // pred_region
      %73 = dma.done [#allocation6], 512
    $region37: #{tpu_custom_call.1} parent=1 // pred_fallthru
      _
    // Predicated region
    $region38: #{tpu_custom_call.1} parent=1 // pred_check
      _
    $region39: #{tpu_custom_call.1} parent=1 // pred_check_branch
      %75 = sbr.rel (0) target = $region41
    $region40: #{tpu_custom_call.1} parent=1 // pred_region
      %76 = dma.done [#allocation9], 512
    $region41: #{tpu_custom_call.1} parent=1 // pred_fallthru
      _
    %v77 = vld [vmem:[#allocation2] sm:$0x3]
    %v78 = vld [vmem:[#allocation7] sm:$0xff]
    %v79 = vld [vmem:[#allocation7 + $0x8] sm:$0xff]
    %v80 = vld [vmem:[#allocation7 + $0x10] sm:$0xff]
    %v81 = vld [vmem:[#allocation7 + $0x18] sm:$0xff]
    %v82 = vld [vmem:[%s4] sm:$0x1]
    %v84 = vlaneseq
    %v85 = vshrl.u32 %v84, 7
    %v86 = vsub.s32 0, %v85
    %v87 = vrot.slane %v82, %v86
    %vm89 = vcmask 261120
    %v91 = vsel %vm89, %v77, 0
    %v94 = vsel %vm89, %v78, 0
    %v97 = vsel %vm89, %v79, 0
    %v100 = vsel %vm89, %v80, 0
    %v103 = vsel %vm89, %v81, 0
    %105 = vmatprep.subr.mxu0 0.0
    %106 = vmatpush1.xpose.msra.mxu0 %v94
    %107 = vmatprep.subr.mxu0 0.0
    %108 = vmatpush1.xpose.msra.mxu0 %v97
    %109 = vmatprep.subr.mxu0 0.0
    %110 = vmatpush1.xpose.msra.mxu0 %v100
    %111 = vmatprep.subr.mxu0 0.0
    %112 = vmatpush1.xpose.msra.mxu0 %v103
    %113 = vmatprep.subr.mxu0 0.0
    %114 = vmatpush1.xpose.msra.mxu0 0.0
    %115 = vmatprep.subr.mxu0 0.0
    %116 = vmatpush1.xpose.msra.mxu0 0.0
    %117 = vmatprep.subr.mxu0 0.0
    %118 = vmatpush1.xpose.msra.mxu0 0.0
    %119 = vmatprep.subr.mxu0 0.0
    %120 = vmatpush1.xpose.msra.mxu0 0.0
    %121 = vmatprep.subr.mxu0 0.0
    %122 = vmatpush1.xpose.msra.mxu0 0.0
    %123 = vmatprep.subr.mxu0 0.0
    %124 = vmatpush1.xpose.msra.mxu0 0.0
    %125 = vmatprep.subr.mxu0 0.0
    %126 = vmatpush1.xpose.msra.mxu0 0.0
    %127 = vmatprep.subr.mxu0 0.0
    %128 = vmatpush1.xpose.msra.mxu0 0.0
    %129 = vmatprep.subr.mxu0 0.0
    %130 = vmatpush1.xpose.msra.mxu0 0.0
    %131 = vmatprep.subr.mxu0 0.0
    %132 = vmatpush1.xpose.msra.mxu0 0.0
    %133 = vmatprep.subr.mxu0 0.0
    %134 = vmatpush1.xpose.msra.mxu0 0.0
    %135 = vmatprep.subr.mxu0 0.0
    %136 = vmatpush1.xpose.msra.mxu0 0.0
    %137 = vmatprep.subr.mxu0 0.0
    %138 = vmatpush1.xpose.msra.mxu0 0.0
    %139 = vmatprep.subr.mxu0 0.0
    %140 = vmatpush1.xpose.msra.mxu0 0.0
    %141 = vmatprep.subr.mxu0 0.0
    %142 = vmatpush1.xpose.msra.mxu0 0.0
    %143 = vmatprep.subr.mxu0 0.0
    %144 = vmatpush1.xpose.msra.mxu0 0.0
    %145 = vmatprep.subr.mxu0 0.0
    %146 = vmatpush1.xpose.msra.mxu0 0.0
    %147 = vmatprep.subr.mxu0 0.0
    %148 = vmatpush1.xpose.msra.mxu0 0.0
    %149 = vmatprep.subr.mxu0 0.0
    %150 = vmatpush1.xpose.msra.mxu0 0.0
    %151 = vmatprep.subr.mxu0 0.0
    %152 = vmatpush1.xpose.msra.mxu0 0.0
    %153 = vmatprep.subr.mxu0 0.0
    %154 = vmatpush1.xpose.msra.mxu0 0.0
    %155 = vmatprep.subr.mxu0 0.0
    %156 = vmatpush1.xpose.msra.mxu0 0.0
    %157 = vmatprep.subr.mxu0 0.0
    %158 = vmatpush1.xpose.msra.mxu0 0.0
    %159 = vmatprep.subr.mxu0 0.0
    %160 = vmatpush1.xpose.msra.mxu0 0.0
    %161 = vmatprep.subr.mxu0 0.0
    %162 = vmatpush1.xpose.msra.mxu0 0.0
    %163 = vmatprep.subr.mxu0 0.0
    %164 = vmatpush1.xpose.msra.mxu0 0.0
    %165 = vmatprep.subr.mxu0 0.0
    %166 = vmatpush1.xpose.msra.mxu0 0.0
    %167 = vmatprep.subr.mxu0 0.0
    %168 = vmatpush1.xpose.msra.mxu0 0.0
    %169 = vmatprep.mubr.f32.mxu0 0.0
    %170 = vmatmul.mubr.f32.gmra.mrb[0].mxu0 %v91
    %v171 = vpop.f32.mrb[0].mxu0
    %v172 = vadd.f32 %v87, %v171
    %v173 = vpop.f32.mrb[0].mxu0
    %174 = vdwg.mxu0
    %v175 = vld [vmem:[#allocation5] sm:$0xff]
    %v176 = vld [vmem:[#allocation5 + $0x8] sm:$0xff]
    %v177 = vld [vmem:[#allocation8] sm:$0xff]
    %v178 = vld [vmem:[#allocation8 + $0x8] sm:$0xff]
    %v179 = vld [vmem:[#allocation8 + $0x10] sm:$0xff]
    %v180 = vld [vmem:[#allocation8 + $0x18] sm:$0xff]
    %v182 = vsel %vm89, %v175, 0
    %v185 = vsel %vm89, %v176, 0
    %v188 = vsel %vm89, %v177, 0
    %v191 = vsel %vm89, %v178, 0
    %v194 = vsel %vm89, %v179, 0
    %v197 = vsel %vm89, %v180, 0
    %199 = vmatprep.subr.mxu0 0.0
    %200 = vmatpush1.xpose.msra.mxu0 %v188
    %201 = vmatprep.subr.mxu0 0.0
    %202 = vmatpush1.xpose.msra.mxu0 %v191
    %203 = vmatprep.subr.mxu0 0.0
    %204 = vmatpush1.xpose.msra.mxu0 %v194
    %205 = vmatprep.subr.mxu0 0.0
    %206 = vmatpush1.xpose.msra.mxu0 %v197
    %207 = vmatprep.subr.mxu0 0.0
    %208 = vmatpush1.xpose.msra.mxu0 0.0
    %209 = vmatprep.subr.mxu0 0.0
    %210 = vmatpush1.xpose.msra.mxu0 0.0
    %211 = vmatprep.subr.mxu0 0.0
    %212 = vmatpush1.xpose.msra.mxu0 0.0
    %213 = vmatprep.subr.mxu0 0.0
    %214 = vmatpush1.xpose.msra.mxu0 0.0
    %215 = vmatprep.subr.mxu0 0.0
    %216 = vmatpush1.xpose.msra.mxu0 0.0
    %217 = vmatprep.subr.mxu0 0.0
    %218 = vmatpush1.xpose.msra.mxu0 0.0
    %219 = vmatprep.subr.mxu0 0.0
    %220 = vmatpush1.xpose.msra.mxu0 0.0
    %221 = vmatprep.subr.mxu0 0.0
    %222 = vmatpush1.xpose.msra.mxu0 0.0
    %223 = vmatprep.subr.mxu0 0.0
    %224 = vmatpush1.xpose.msra.mxu0 0.0
    %225 = vmatprep.subr.mxu0 0.0
    %226 = vmatpush1.xpose.msra.mxu0 0.0
    %227 = vmatprep.subr.mxu0 0.0
    %228 = vmatpush1.xpose.msra.mxu0 0.0
    %229 = vmatprep.subr.mxu0 0.0
    %230 = vmatpush1.xpose.msra.mxu0 0.0
    %231 = vmatprep.subr.mxu0 0.0
    %232 = vmatpush1.xpose.msra.mxu0 0.0
    %233 = vmatprep.subr.mxu0 0.0
    %234 = vmatpush1.xpose.msra.mxu0 0.0
    %235 = vmatprep.subr.mxu0 0.0
    %236 = vmatpush1.xpose.msra.mxu0 0.0
    %237 = vmatprep.subr.mxu0 0.0
    %238 = vmatpush1.xpose.msra.mxu0 0.0
    %239 = vmatprep.subr.mxu0 0.0
    %240 = vmatpush1.xpose.msra.mxu0 0.0
    %241 = vmatprep.subr.mxu0 0.0
    %242 = vmatpush1.xpose.msra.mxu0 0.0
    %243 = vmatprep.subr.mxu0 0.0
    %244 = vmatpush1.xpose.msra.mxu0 0.0
    %245 = vmatprep.subr.mxu0 0.0
    %246 = vmatpush1.xpose.msra.mxu0 0.0
    %247 = vmatprep.subr.mxu0 0.0
    %248 = vmatpush1.xpose.msra.mxu0 0.0
    %249 = vmatprep.subr.mxu0 0.0
    %250 = vmatpush1.xpose.msra.mxu0 0.0
    %251 = vmatprep.subr.mxu0 0.0
    %252 = vmatpush1.xpose.msra.mxu0 0.0
    %253 = vmatprep.subr.mxu0 0.0
    %254 = vmatpush1.xpose.msra.mxu0 0.0
    %255 = vmatprep.subr.mxu0 0.0
    %256 = vmatpush1.xpose.msra.mxu0 0.0
    %257 = vmatprep.subr.mxu0 0.0
    %258 = vmatpush1.xpose.msra.mxu0 0.0
    %259 = vmatprep.subr.mxu0 0.0
    %260 = vmatpush1.xpose.msra.mxu0 0.0
    %261 = vmatprep.subr.mxu0 0.0
    %262 = vmatpush1.xpose.msra.mxu0 0.0
    %263 = vmatprep.mubr.f32.mxu0 0.0
    %264 = vmatmul.mubr.f32.gmra.mrb[0].mxu0 %v182
    %v265 = vpop.f32.mrb[0].mxu0
    %v266 = vadd.f32 0.0, %v265
    %v267 = vpop.f32.mrb[0].mxu0
    %268 = vmatprep.mubr.f32.mxu0 0.0
    %269 = vmatmul.mubr.f32.gmra.mrb[0].mxu0 %v185
    %v270 = vpop.f32.mrb[0].mxu0
    %v271 = vadd.f32 0.0, %v270
    %v272 = vpop.f32.mrb[0].mxu0
    %273 = vdwg.mxu0
    %v276 = vunpack.c.l.s4 1966171168
    %v277 = vunpack.c.0.s8 %v276
    %v278 = vlaneseq
    %v279 = vshrl.u32 %v278, 7
    %v280 = vsub.s32 %v277, %v279
    %v281 = vrot.slane %v172, %v280
    %v282 = vcombine.high %v281, %v281
    %v284 = vunpack.c.l.s4 1966171168
    %v285 = vunpack.c.0.s8 %v284
    %v286 = vlaneseq
    %v287 = vshrl.u32 %v286, 7
    %v288 = vsub.s32 %v285, %v287
    %v289 = vrot.slane %v281, %v288
    %v291 = vunpack.c.l.s4 1966171168
    %v292 = vunpack.c.0.s8 %v291
    %v293 = vlaneseq
    %v294 = vshrl.u32 %v293, 7
    %v295 = vsub.s32 %v292, %v294
    %v296 = vrot.slane %v282, %v295
    %v297 = vlaneseq
    %v298 = vshrl.u32 %v297, 7
    %v299 = vsub.s32 0, %v298
    %v300 = vrot.slane %v289, %v299
    %v301 = vlaneseq
    %v302 = vshrl.u32 %v301, 7
    %v303 = vsub.s32 0, %v302
    %v304 = vrot.slane %v296, %v303
    %v307 = vadd.f32 %v266, %v300
    %v308 = vadd.f32 %v271, %v304
    %v309 = vtanh.pop %v307
    %v310 = vtanh.pop %v308
    %v311 = vld [vmem:[%s5] sm:$0x1]
    %v313 = vlaneseq
    %v314 = vshrl.u32 %v313, 7
    %v315 = vsub.s32 0, %v314
    %v316 = vrot.slane %v311, %v315
    %v318 = vmul.f32 %v309, %v316
    %v319 = vmul.f32 %v310, %v316
    %v320 = vsel %vm89, %v318, 0.0
    %321 = vadd.xlane.f32.xlu0 %v320
    %v322 = vpop.xlane.xlu0 %321
    %v323 = vsel %vm89, %v319, 0.0
    %324 = vadd.xlane.f32.xlu0 %v323
    %v325 = vpop.xlane.xlu0 %324
    %v328 = vlaneseq
    %v329 = vand.u32 %v328, 127
    %v330 = vlaneseq
    %v331 = vshrl.u32 %v330, 7
    %v332 = vsub.s32 %v329, %v331
    %v333 = vrot.slane %v322, %v332
    %v334 = vlaneseq
    %v335 = vshrl.u32 %v334, 7
    %v336 = vsub.s32 %v329, %v335
    %v337 = vrot.slane %v325, %v336
    %vm338 = vcmask 1041409
    %v339 = vsel %vm338, %v337, %v333
    %vm341 = vcmask 58368
    %v342 = vsel %vm341, %v339, -inf
    %343 = vmax.xlane.f32.xlu0 %v342
    %v344 = vpop.xlane.xlu0 %343
    %v346 = vlaneseq
    %v347 = vshrl.u32 %v346, 7
    %v348 = vsub.s32 0, %v347
    %v349 = vrot.slane %v344, %v348
    %v350 = vlaneseq
    %v351 = vshrl.u32 %v350, 7
    %v352 = vsub.s32 1, %v351
    %v353 = vrot.slane %v344, %v352
    %v356 = vsub.f32 %v322, %v349
    %v357 = vsub.f32 %v325, %v353
    %v358 = vmul.f32 %v356, 1.442695
    %v359 = vpow.pop %v358
    %v360 = vmul.f32 %v357, 1.442695
    %v361 = vpow.pop %v360
    %364 = vset.pattern.permute.xlu0 0
    %365 = vperm.xlu0 %364, %v359
    %v366 = vpop.permute.xlu0 %365
    %367 = vset.pattern.permute.xlu0 0
    %368 = vperm.xlu0 %367, %v361
    %v369 = vpop.permute.xlu0 %368
    %v370 = vlaneseq
    %v371 = vshrl.u32 %v370, 7
    %v372 = vsub.s32 %v329, %v371
    %v373 = vrot.slane %v366, %v372
    %v374 = vlaneseq
    %v375 = vshrl.u32 %v374, 7
    %v376 = vsub.s32 %v329, %v375
    %v377 = vrot.slane %v369, %v376
    %v378 = vsel %vm338, %v377, %v373
    %v380 = vsel %vm341, %v378, 0.0
    %381 = vadd.xlane.f32.xlu0 %v380
    %v382 = vpop.xlane.xlu0 %381
    %v384 = vlaneseq
    %v385 = vshrl.u32 %v384, 7
    %v386 = vsub.s32 0, %v385
    %v387 = vrot.slane %v382, %v386
    %v388 = vlaneseq
    %v389 = vshrl.u32 %v388, 7
    %v390 = vsub.s32 1, %v389
    %v391 = vrot.slane %v382, %v390
    %v394 = vrcp.pop %v387
    %v395 = vmul.f32 %v359, %v394
    %v396 = vrcp.pop %v391
    %v397 = vmul.f32 %v361, %v396
    %400 = vset.pattern.permute.xlu0 0
    %401 = vperm.xlu0 %400, %v395
    %v402 = vpop.permute.xlu0 %401
    %403 = vset.pattern.permute.xlu0 0
    %404 = vperm.xlu0 %403, %v397
    %v405 = vpop.permute.xlu0 %404
    %v406 = vlaneseq
    %v407 = vshrl.u32 %v406, 7
    %v408 = vsub.s32 %v329, %v407
    %v409 = vrot.slane %v402, %v408
    %v410 = vlaneseq
    %v411 = vshrl.u32 %v410, 7
    %v412 = vsub.s32 %v329, %v411
    %v413 = vrot.slane %v405, %v412
    %v414 = vsel %vm338, %v413, %v409
    %416 = vst.msk [vmem:[#allocation10] sm:$0x3] %vm341, %v414
    // Predicated region
    $region42: #{tpu_custom_call.1} parent=1 // pred_check
      _
    $region43: #{tpu_custom_call.1} parent=1 // pred_check_branch
      %418 = sbr.rel (0) target = $region45
    $region44: #{tpu_custom_call.1} parent=1 // pred_region
      %s420 = ssub.s32 32, 32
      %421 = vsyncadd [#allocation4], %s420
      %s423 = sshll.u32 [#allocation10], 4
      %s424 = int_to_ptr.vmem [resolvable:$true] %s423
      %426 = dma.vmem_to_hbm [thread:$0]  %s424, 32, %s6, [#allocation4]
    $region45: #{tpu_custom_call.1} parent=1 // pred_fallthru
      _
    // Predicated region
    $region46: #{tpu_custom_call.1} parent=1 // pred_check
      _
    $region47: #{tpu_custom_call.1} parent=1 // pred_check_branch
      %428 = sbr.rel (0) target = $region49
    $region48: #{tpu_custom_call.1} parent=1 // pred_region
      %429 = dma.done [#allocation4], 32
    $region49: #{tpu_custom_call.1} parent=1 // pred_fallthru
      _
    %430 = vsyncpa [#allocation3], 1
    %431 = vsyncpa [#allocation6], 1
    %432 = vsyncpa [#allocation9], 1
    %433 = vsyncpa [#allocation4], 1

</llo_original>
